<compile_context>
chip_gen: v7x
topology: tpu7x:2x2x1
jax: 0.10.0
libtpu: 0.0.40
codegen_flags: <defaults>
</compile_context>

<pallas_src>
import functools

import jax
import jax.numpy as jnp
from jax import lax
from jax.experimental import pallas as pl
from jax.experimental.pallas import tpu as pltpu

_NEG_BIG = -1e30   # bias for padded logit lanes: exp() underflows to 0 in the softmax


# ----------------------------- VMEM / tile planning ---------------------------------
def _vmem_limit_bytes():
    """~80% of this generation's per-core VMEM (headroom for Mosaic internal scratch)."""
    try:
        cap = int(pltpu.get_tpu_info().vmem_capacity_bytes)   # 128 MiB v5e/v6e, 64 MiB v7x
    except Exception:
        cap = 64 * 1024 * 1024                                # conservative (v7x) fallback
    return int(cap * 0.8)


def _select_tile(n_pad, f_pad, vmem_budget):
    """Largest square tile (rows x contraction) that divides n_pad and fits the budget."""
    for t in (1024, 512, 256, 128):
        if n_pad % t:
            continue
        footprint = (2 * t * t * 2          # A_hat tile, bf16, double-buffered
                     + 2 * t * f_pad * 2    # z contraction rows, bf16, double-buffered
                     + 2 * t * f_pad * 4    # output tile (worst case f32), double-buffered
                     + t * f_pad * 4)       # f32 accumulator scratch
        if footprint <= (2 * vmem_budget) // 3:   # leave headroom inside the scoped limit
            return t
    return 128


# ----------------------------- Pallas kernels ---------------------------------
def _hop_kernel(a_ref, z_ref, o_ref, acc_ref):
    """One propagation hop: o[rows] = sum_k A_hat[rows, k-tile] @ z[k-tile].  f32 accumulate."""
    k = pl.program_id(1)

    @pl.when(k == 0)
    def _init():
        acc_ref[...] = jnp.zeros_like(acc_ref)

    acc_ref[...] += jnp.dot(a_ref[...], z_ref[...],
                            preferred_element_type=jnp.float32)

    @pl.when(k == pl.num_programs(1) - 1)
    def _store():
        o_ref[...] = acc_ref[...].astype(o_ref.dtype)


def _hop_bias_logsoftmax_kernel(a_ref, z_ref, b_ref, o_ref, acc_ref):
    """Final hop fused with bias add and log_softmax (all in f32)."""
    k = pl.program_id(1)

    @pl.when(k == 0)
    def _init():
        acc_ref[...] = jnp.zeros_like(acc_ref)

    acc_ref[...] += jnp.dot(a_ref[...], z_ref[...],
                            preferred_element_type=jnp.float32)

    @pl.when(k == pl.num_programs(1) - 1)
    def _finalize():
        h = acc_ref[...] + b_ref[...]
        m = jnp.max(h, axis=1, keepdims=True)
        zc = h - m
        o_ref[...] = zc - jnp.log(jnp.sum(jnp.exp(zc), axis=1, keepdims=True))


# --------------------------- pallas_call wrappers ------------------------------
def _hop_matmul(a_pad, z, *, tile, vmem_limit):
    n_pad = a_pad.shape[0]
    f_pad = z.shape[1]
    return pl.pallas_call(
        _hop_kernel,
        out_shape=jax.ShapeDtypeStruct((n_pad, f_pad), jnp.bfloat16),
        grid_spec=pltpu.PrefetchScalarGridSpec(
            num_scalar_prefetch=0,
            grid=(n_pad // tile, n_pad // tile),          # (row tiles, contraction tiles)
            in_specs=[
                pl.BlockSpec((tile, tile), lambda i, k: (i, k)),    # A_hat row/col tile (streamed)
                pl.BlockSpec((tile, f_pad), lambda i, k: (k, 0)),   # z contraction rows
            ],
            out_specs=pl.BlockSpec((tile, f_pad), lambda i, k: (i, 0)),
            scratch_shapes=[pltpu.VMEM((tile, f_pad), jnp.float32)],
        ),
        compiler_params=pltpu.CompilerParams(
            dimension_semantics=("parallel", "arbitrary"),   # rows megacore-shardable, k serial
            vmem_limit_bytes=vmem_limit),
    )(a_pad, z)


def _hop_matmul_bias_logsoftmax(a_pad, z, bias2d, *, tile, vmem_limit):
    n_pad = a_pad.shape[0]
    f_pad = z.shape[1]
    return pl.pallas_call(
        _hop_bias_logsoftmax_kernel,
        out_shape=jax.ShapeDtypeStruct((n_pad, f_pad), jnp.float32),
        grid_spec=pltpu.PrefetchScalarGridSpec(
            num_scalar_prefetch=0,
            grid=(n_pad // tile, n_pad // tile),
            in_specs=[
                pl.BlockSpec((tile, tile), lambda i, k: (i, k)),
                pl.BlockSpec((tile, f_pad), lambda i, k: (k, 0)),
                pl.BlockSpec((1, f_pad), lambda i, k: (0, 0)),      # tiny invariant bias row
            ],
            out_specs=pl.BlockSpec((tile, f_pad), lambda i, k: (i, 0)),
            scratch_shapes=[pltpu.VMEM((tile, f_pad), jnp.float32)],
        ),
        compiler_params=pltpu.CompilerParams(
            dimension_semantics=("parallel", "arbitrary"),
            vmem_limit_bytes=vmem_limit),
    )(a_pad, z, bias2d)


# -------------------------------- JAX glue -------------------------------------
def build_normalized_adjacency(edge_index, n, *, n_pad=None, dtype=jnp.bfloat16):
    """GCN symmetric normalization with self loops: D^-1/2 (A | A.T | I) D^-1/2.

    Does not depend on node features: build it once (optionally already zero-padded to
    n_pad x n_pad) and pass it to sgc_forward, mirroring PUPropagate's propagation matrix.
    """
    if n_pad is None:
        n_pad = n
    src, dst = edge_index[0], edge_index[1]
    adj = jnp.zeros((n_pad, n_pad), jnp.float32).at[dst, src].set(1.0)
    adj = jnp.maximum(adj, adj.T)                       # undirected
    diag = jnp.arange(n)
    adj = adj.at[diag, diag].set(1.0)                   # self loops (only for real nodes)
    deg = adj.sum(axis=1)
    d_inv_sqrt = jnp.where(deg > 0, lax.rsqrt(deg), 0.0)
    return (d_inv_sqrt[:, None] * adj * d_inv_sqrt[None, :]).astype(dtype)


def sgc_forward(x, edge_index, weight, bias, *, K, a_hat=None):
    """SGC forward: log_softmax(A_hat^K X W^T + b).

    The linear projection is applied BEFORE the K propagation hops, which is exact
    ((A^K X) W^T == A^K (X W^T)) and shrinks every hop matmul when F_OUT < F_IN.
    """
    n, _ = x.shape
    f_out = weight.shape[0]
    f_pad = 128 * pl.cdiv(f_out, 128)   # lane-dense feature axis for the propagation path
    n_pad = 128 * pl.cdiv(n, 128)       # node axis padded so every tile divides evenly

    # TODO(synk): Compressgnn_Cluster / Compressgnn_Reconstruct definitions are not provided;
    # modeled as identity compression/reconstruction (exact for a per-row Linear + log_softmax).

    if K == 0:
        # Degenerate config: no propagation; negligible work, let XLA handle it.
        return jax.nn.log_softmax(x @ weight.T + bias[None, :], axis=1)

    if a_hat is None:
        a_hat = build_normalized_adjacency(edge_index, n, n_pad=n_pad, dtype=jnp.bfloat16)
    a_hat = a_hat.astype(jnp.bfloat16)
    if a_hat.shape[0] != n_pad:
        a_hat = jnp.pad(a_hat, ((0, n_pad - a_hat.shape[0]), (0, n_pad - a_hat.shape[1])))

    # Initial projection in plain XLA (f32): (N, F_IN) @ (F_IN, F_OUT) is negligible FLOPs and
    # its 32-wide contraction would underfill the MXU / force masked loads inside Pallas.
    z0 = jnp.dot(x.astype(jnp.float32), weight.T.astype(jnp.float32))
    z0 = jnp.pad(z0, ((0, n_pad - n), (0, f_pad - f_out))).astype(jnp.bfloat16)

    # Zero-padded weight columns keep padded feature lanes exactly 0 through all hops;
    # a very negative padded bias makes those lanes vanish in the log_softmax.
    b_pad = jnp.pad(bias.astype(jnp.float32), (0, f_pad - f_out),
                    constant_values=_NEG_BIG)[None, :]

    vmem_limit = _vmem_limit_bytes()
    tile = _select_tile(n_pad, f_pad, vmem_limit)

    z = z0
    for _ in range(K - 1):
        z = _hop_matmul(a_hat, z, tile=tile, vmem_limit=vmem_limit)          # hops 1 .. K-1
    out_pad = _hop_matmul_bias_logsoftmax(a_hat, z, b_pad,
                                          tile=tile, vmem_limit=vmem_limit)  # hop K + bias + lsm

    return out_pad[:n, :f_out]


# ---------------------------------- demo ---------------------------------------
if __name__ == "__main__":
    key = jax.random.PRNGKey(0)
    k_x, k_e, k_w, k_b = jax.random.split(key, 4)

    N = 64          # nodes
    F_IN = 32       # in_features
    F_OUT = 16      # out_features
    K = 2           # propagation hops
    E = 256         # number of directed edges

    x = jax.random.normal(k_x, (N, F_IN), dtype=jnp.float32)
    edge_index = jax.random.randint(k_e, (2, E), 0, N, dtype=jnp.int32)

    # Deterministic torch.nn.Linear-style init: U(-1/sqrt(fan_in), 1/sqrt(fan_in)).
    bound = 1.0 / (F_IN ** 0.5)
    weight = jax.random.uniform(k_w, (F_OUT, F_IN), jnp.float32, -bound, bound)
    bias = jax.random.uniform(k_b, (F_OUT,), jnp.float32, -bound, bound)

    # Hoist the propagation matrix out of the per-call path (it does not depend on x).
    # (Callers can go further and cache A_hat^K to collapse the K hop matmuls into one.)
    N_PAD = 128 * pl.cdiv(N, 128)
    a_hat = build_normalized_adjacency(edge_index, N, n_pad=N_PAD, dtype=jnp.bfloat16)

    fwd = jax.jit(functools.partial(sgc_forward, K=K))
    out = jax.block_until_ready(fwd(x, edge_index, weight, bias, a_hat=a_hat))

    assert out.shape == (N, F_OUT)
    # rows of log_softmax must exp-sum to 1
    assert jnp.allclose(jnp.sum(jnp.exp(out), axis=1), 1.0, atol=1e-4)

    # f32 pure-JAX reference (original op order); bf16 kernel should track it closely.
    a_ref = build_normalized_adjacency(edge_index, N, dtype=jnp.float32)
    h = x
    for _ in range(K):
        h = a_ref @ h
    ref = jax.nn.log_softmax(h @ weight.T + bias, axis=1)
    assert jnp.max(jnp.abs(out - ref)) < 0.1

    print("KERNEL_OK")
</pallas_src>

<mosaic_0001>
module attributes {stable_mosaic.version = 11 : i64} {
  func.func @_hop_bias_logsoftmax_kernel(%arg0: i32, %arg1: i32, %arg2: memref<128x128xbf16, #tpu.memory_space<vmem>>, %arg3: memref<128x128xbf16, #tpu.memory_space<vmem>>, %arg4: memref<1x128xf32, #tpu.memory_space<vmem>>, %arg5: memref<128x128xf32, #tpu.memory_space<vmem>>, %arg6: memref<128x128xf32, #tpu.memory_space<vmem>>) attributes {dimension_semantics = [#tpu.dimension_semantics<parallel>, #tpu.dimension_semantics<arbitrary>], iteration_bounds = array<i64: 1, 1>, scalar_prefetch = 0 : i64, scratch_operands = 1 : i64, tpu.core_type = #tpu.core_type<tc>, window_params = [{transform_indices = @transform_0, window_bounds = array<i64: 128, 128>}, {transform_indices = @transform_1, window_bounds = array<i64: 128, 128>}, {pipeline_mode = #tpu.pipeline_mode<synchronous>, transform_indices = @transform_2, window_bounds = array<i64: 1, 128>}, {transform_indices = @transform_3, window_bounds = array<i64: 128, 128>}]} {
    %c0_i32 = arith.constant 0 : i32
    %0 = arith.cmpi eq, %arg1, %c0_i32 : i32
    %1 = arith.extui %0 : i1 to i32
    %c0_i32_0 = arith.constant 0 : i32
    %2 = arith.cmpi ne, %1, %c0_i32_0 : i32
    scf.if %2 {
      %cst_10 = arith.constant 0.000000e+00 : f32
      %12 = vector.broadcast %cst_10 : f32 to vector<128x128xf32>
      %c0_11 = arith.constant 0 : index
      %c0_12 = arith.constant 0 : index
      %13 = vector.load %arg6[%c0_11, %c0_12] : memref<128x128xf32, #tpu.memory_space<vmem>>, vector<128x128xf32>
      tpu.vector_store %arg6[%c0_11, %c0_12], %12 {strides = array<i32>} : memref<128x128xf32, #tpu.memory_space<vmem>>, vector<128x128xf32>,
    } else {
    }
    %c0 = arith.constant 0 : index
    %c0_1 = arith.constant 0 : index
    %3 = vector.load %arg6[%c0, %c0_1] : memref<128x128xf32, #tpu.memory_space<vmem>>, vector<128x128xf32>
    %c0_2 = arith.constant 0 : index
    %c0_3 = arith.constant 0 : index
    %4 = vector.load %arg2[%c0_2, %c0_3] : memref<128x128xbf16, #tpu.memory_space<vmem>>, vector<128x128xbf16>
    %c0_4 = arith.constant 0 : index
    %c0_5 = arith.constant 0 : index
    %5 = vector.load %arg3[%c0_4, %c0_5] : memref<128x128xbf16, #tpu.memory_space<vmem>>, vector<128x128xbf16>
    %cst = arith.constant dense<0.000000e+00> : vector<128x128xf32>
    %6 = tpu.matmul %4, %5, %cst {dimension_numbers = #tpu.dot_dimension_numbers<[1], [0], [0], [1], [0, 0, 1, 1], [], []>} : vector<128x128xbf16>, vector<128x128xbf16>, vector<128x128xf32> -> vector<128x128xf32>
    %7 = arith.addf %3, %6 : vector<128x128xf32>
    %c0_6 = arith.constant 0 : index
    %c0_7 = arith.constant 0 : index
    %8 = vector.load %arg6[%c0_6, %c0_7] : memref<128x128xf32, #tpu.memory_space<vmem>>, vector<128x128xf32>
    tpu.vector_store %arg6[%c0_6, %c0_7], %7 {strides = array<i32>} : memref<128x128xf32, #tpu.memory_space<vmem>>, vector<128x128xf32>,
    %c0_i32_8 = arith.constant 0 : i32
    %9 = arith.cmpi eq, %arg1, %c0_i32_8 : i32
    %10 = arith.extui %9 : i1 to i32
    %c0_i32_9 = arith.constant 0 : i32
    %11 = arith.cmpi ne, %10, %c0_i32_9 : i32
    scf.if %11 {
      %c0_10 = arith.constant 0 : index
      %c0_11 = arith.constant 0 : index
      %12 = vector.load %arg6[%c0_10, %c0_11] : memref<128x128xf32, #tpu.memory_space<vmem>>, vector<128x128xf32>
      %c0_12 = arith.constant 0 : index
      %c0_13 = arith.constant 0 : index
      %13 = vector.load %arg4[%c0_12, %c0_13] : memref<1x128xf32, #tpu.memory_space<vmem>>, vector<1x128xf32>
      %14 = vector.broadcast %13 : vector<1x128xf32> to vector<128x128xf32>
      %15 = arith.addf %12, %14 : vector<128x128xf32>
      %cst_14 = arith.constant dense<0xFF800000> : vector<128xf32>
      %16 = vector.multi_reduction <maximumf>, %15, %cst_14 [1] : vector<128x128xf32> to vector<128xf32>
      %17 = vector.shape_cast %16 : vector<128xf32> to vector<128x1xf32>
      %18 = vector.broadcast %17 : vector<128x1xf32> to vector<128x128xf32>
      %19 = arith.subf %15, %18 : vector<128x128xf32>
      %20 = math.exp %19 : vector<128x128xf32>
      %cst_15 = arith.constant dense<0.000000e+00> : vector<128xf32>
      %21 = vector.multi_reduction <add>, %20, %cst_15 [1] : vector<128x128xf32> to vector<128xf32>
      %22 = vector.shape_cast %21 : vector<128xf32> to vector<128x1xf32>
      %23 = math.log %22 : vector<128x1xf32>
      %24 = vector.broadcast %23 : vector<128x1xf32> to vector<128x128xf32>
      %25 = arith.subf %19, %24 : vector<128x128xf32>
      %c0_16 = arith.constant 0 : index
      %c0_17 = arith.constant 0 : index
      %26 = vector.load %arg5[%c0_16, %c0_17] : memref<128x128xf32, #tpu.memory_space<vmem>>, vector<128x128xf32>
      tpu.vector_store %arg5[%c0_16, %c0_17], %25 {strides = array<i32>} : memref<128x128xf32, #tpu.memory_space<vmem>>, vector<128x128xf32>,
    } else {
    }
    return
  }
  func.func @transform_0(%arg0: i32, %arg1: i32) -> (i32, i32) {
    %c0_i32 = arith.constant 0 : i32
    return %arg0, %arg1 : i32, i32
  }
  func.func @transform_1(%arg0: i32, %arg1: i32) -> (i32, i32) {
    %c0_i32 = arith.constant 0 : i32
    %c0_i32_0 = arith.constant 0 : i32
    return %arg1, %c0_i32 : i32, i32
  }
  func.func @transform_2(%arg0: i32, %arg1: i32) -> (i32, i32) {
    %c0_i32 = arith.constant 0 : i32
    %c0_i32_0 = arith.constant 0 : i32
    %c0_i32_1 = arith.constant 0 : i32
    return %c0_i32, %c0_i32_0 : i32, i32
  }
  func.func @transform_3(%arg0: i32, %arg1: i32) -> (i32, i32) {
    %c0_i32 = arith.constant 0 : i32
    %c0_i32_0 = arith.constant 0 : i32
    return %arg0, %c0_i32 : i32, i32
  }
}

module attributes {stable_mosaic.version = 11 : i64} {
  func.func @_hop_kernel(%arg0: i32, %arg1: i32, %arg2: memref<128x128xbf16, #tpu.memory_space<vmem>>, %arg3: memref<128x128xbf16, #tpu.memory_space<vmem>>, %arg4: memref<128x128xbf16, #tpu.memory_space<vmem>>, %arg5: memref<128x128xf32, #tpu.memory_space<vmem>>) attributes {dimension_semantics = [#tpu.dimension_semantics<parallel>, #tpu.dimension_semantics<arbitrary>], iteration_bounds = array<i64: 1, 1>, scalar_prefetch = 0 : i64, scratch_operands = 1 : i64, tpu.core_type = #tpu.core_type<tc>, window_params = [{transform_indices = @transform_0, window_bounds = array<i64: 128, 128>}, {transform_indices = @transform_1, window_bounds = array<i64: 128, 128>}, {transform_indices = @transform_2, window_bounds = array<i64: 128, 128>}]} {
    %c0_i32 = arith.constant 0 : i32
    %0 = arith.cmpi eq, %arg1, %c0_i32 : i32
    %1 = arith.extui %0 : i1 to i32
    %c0_i32_0 = arith.constant 0 : i32
    %2 = arith.cmpi ne, %1, %c0_i32_0 : i32
    scf.if %2 {
      %cst_10 = arith.constant 0.000000e+00 : f32
      %12 = vector.broadcast %cst_10 : f32 to vector<128x128xf32>
      %c0_11 = arith.constant 0 : index
      %c0_12 = arith.constant 0 : index
      %13 = vector.load %arg5[%c0_11, %c0_12] : memref<128x128xf32, #tpu.memory_space<vmem>>, vector<128x128xf32>
      tpu.vector_store %arg5[%c0_11, %c0_12], %12 {strides = array<i32>} : memref<128x128xf32, #tpu.memory_space<vmem>>, vector<128x128xf32>,
    } else {
    }
    %c0 = arith.constant 0 : index
    %c0_1 = arith.constant 0 : index
    %3 = vector.load %arg5[%c0, %c0_1] : memref<128x128xf32, #tpu.memory_space<vmem>>, vector<128x128xf32>
    %c0_2 = arith.constant 0 : index
    %c0_3 = arith.constant 0 : index
    %4 = vector.load %arg2[%c0_2, %c0_3] : memref<128x128xbf16, #tpu.memory_space<vmem>>, vector<128x128xbf16>
    %c0_4 = arith.constant 0 : index
    %c0_5 = arith.constant 0 : index
    %5 = vector.load %arg3[%c0_4, %c0_5] : memref<128x128xbf16, #tpu.memory_space<vmem>>, vector<128x128xbf16>
    %cst = arith.constant dense<0.000000e+00> : vector<128x128xf32>
    %6 = tpu.matmul %4, %5, %cst {dimension_numbers = #tpu.dot_dimension_numbers<[1], [0], [0], [1], [0, 0, 1, 1], [], []>} : vector<128x128xbf16>, vector<128x128xbf16>, vector<128x128xf32> -> vector<128x128xf32>
    %7 = arith.addf %3, %6 : vector<128x128xf32>
    %c0_6 = arith.constant 0 : index
    %c0_7 = arith.constant 0 : index
    %8 = vector.load %arg5[%c0_6, %c0_7] : memref<128x128xf32, #tpu.memory_space<vmem>>, vector<128x128xf32>
    tpu.vector_store %arg5[%c0_6, %c0_7], %7 {strides = array<i32>} : memref<128x128xf32, #tpu.memory_space<vmem>>, vector<128x128xf32>,
    %c0_i32_8 = arith.constant 0 : i32
    %9 = arith.cmpi eq, %arg1, %c0_i32_8 : i32
    %10 = arith.extui %9 : i1 to i32
    %c0_i32_9 = arith.constant 0 : i32
    %11 = arith.cmpi ne, %10, %c0_i32_9 : i32
    scf.if %11 {
      %c0_10 = arith.constant 0 : index
      %c0_11 = arith.constant 0 : index
      %12 = vector.load %arg5[%c0_10, %c0_11] : memref<128x128xf32, #tpu.memory_space<vmem>>, vector<128x128xf32>
      %13 = arith.truncf %12 : vector<128x128xf32> to vector<128x128xbf16>
      %c0_12 = arith.constant 0 : index
      %c0_13 = arith.constant 0 : index
      %14 = vector.load %arg4[%c0_12, %c0_13] : memref<128x128xbf16, #tpu.memory_space<vmem>>, vector<128x128xbf16>
      tpu.vector_store %arg4[%c0_12, %c0_13], %13 {strides = array<i32>} : memref<128x128xbf16, #tpu.memory_space<vmem>>, vector<128x128xbf16>,
    } else {
    }
    return
  }
  func.func @transform_0(%arg0: i32, %arg1: i32) -> (i32, i32) {
    %c0_i32 = arith.constant 0 : i32
    return %arg0, %arg1 : i32, i32
  }
  func.func @transform_1(%arg0: i32, %arg1: i32) -> (i32, i32) {
    %c0_i32 = arith.constant 0 : i32
    %c0_i32_0 = arith.constant 0 : i32
    return %arg1, %c0_i32 : i32, i32
  }
  func.func @transform_2(%arg0: i32, %arg1: i32) -> (i32, i32) {
    %c0_i32 = arith.constant 0 : i32
    %c0_i32_0 = arith.constant 0 : i32
    return %arg0, %c0_i32 : i32, i32
  }
}

</mosaic_0001>

<llo_original>
// kernel: sgc_forward.3
$region0: #{sgc_forward.3}
  #allocation0 [shape = 'u32[]', space=smem, size = 0x4, offset = 0x4, fixed_abs, tag = 'smem constant byte address 0x4 - core index']
  #allocation1 [shape = 'u32[144,128]{1,0:T(1,128)}', space=vmem, size = 0x12000, scoped, tag = 'internal scratch']
  #allocation2 [shape = 'f32[128,128]{1,0:T(8,128)}', space=vmem, size = 0x10000, scoped, tag = 'scratch operand']
  %s0 = inlined_call_operand.vmem [shape: bf16[128,128], index: 0, kind: input, shape index: {}]
  %s1 = inlined_call_operand.vmem [shape: bf16[128,128], index: 1, kind: input, shape index: {}]
  %s2 = inlined_call_operand.vmem [shape: f32[1,128], index: 2, kind: input, shape index: {}]
  %s3 = inlined_call_operand.vmem [shape: f32[128,128], index: 3, kind: output, shape index: {}]
  %s4 = sld [smem:[#allocation0]]
  $region30: #{sgc_forward.3} parent=0
    _
  %s6 = ssub.s32 1, %s4
  %s7 = scalar_select 0, %s6, %s4
  // Predicated region
  $region2: #{sgc_forward.3} parent=0 // pred_check
    _
  $region3: #{sgc_forward.3} parent=0 // pred_check_branch
    %9 = sbr.rel (0) target = $region5
  $region4: #{sgc_forward.3} parent=0 // pred_region
    _
  $region5: #{sgc_forward.3} parent=0 // pred_fallthru
    _
  // Predicated region
  $region6: #{sgc_forward.3} parent=0 // pred_check
    _
  $region7: #{sgc_forward.3} parent=0 // pred_check_branch
    %11 = sbr.rel (0) target = $region9
  $region8: #{sgc_forward.3} parent=0 // pred_region
    _
  $region9: #{sgc_forward.3} parent=0 // pred_fallthru
    _
  // Predicated region
  $region10: #{sgc_forward.3} parent=0 // pred_check
    _
  $region11: #{sgc_forward.3} parent=0 // pred_check_branch
    %13 = sbr.rel (0) target = $region13
  $region12: #{sgc_forward.3} parent=0 // pred_region
    _
  $region13: #{sgc_forward.3} parent=0 // pred_fallthru
    _
  %p15 = scmp.eq.s32.totalorder 0, 0
  // Predicated region
  $region14: #{sgc_forward.3} parent=0 // pred_check
    %p16 = pneg %p15
  $region15: #{sgc_forward.3} parent=0 // pred_check_branch
    %18 = sbr.rel (%p16) target = $region17
  $region16: #{sgc_forward.3} parent=0 // pred_region
    %19 = vst [vmem:[#allocation2] sm:$0xff] 0.0
    %20 = vst [vmem:[#allocation2 + $0x8] sm:$0xff] 0.0
    %21 = vst [vmem:[#allocation2 + $0x10] sm:$0xff] 0.0
    %22 = vst [vmem:[#allocation2 + $0x18] sm:$0xff] 0.0
    %23 = vst [vmem:[#allocation2 + $0x20] sm:$0xff] 0.0
    %24 = vst [vmem:[#allocation2 + $0x28] sm:$0xff] 0.0
    %25 = vst [vmem:[#allocation2 + $0x30] sm:$0xff] 0.0
    %26 = vst [vmem:[#allocation2 + $0x38] sm:$0xff] 0.0
    %27 = vst [vmem:[#allocation2 + $0x40] sm:$0xff] 0.0
    %28 = vst [vmem:[#allocation2 + $0x48] sm:$0xff] 0.0
    %29 = vst [vmem:[#allocation2 + $0x50] sm:$0xff] 0.0
    %30 = vst [vmem:[#allocation2 + $0x58] sm:$0xff] 0.0
    %31 = vst [vmem:[#allocation2 + $0x60] sm:$0xff] 0.0
    %32 = vst [vmem:[#allocation2 + $0x68] sm:$0xff] 0.0
    %33 = vst [vmem:[#allocation2 + $0x70] sm:$0xff] 0.0
    %34 = vst [vmem:[#allocation2 + $0x78] sm:$0xff] 0.0
  $region17: #{sgc_forward.3} parent=0 // pred_fallthru
    _
  %v35 = vld [vmem:[#allocation2] sm:$0xff]
  %v36 = vld [vmem:[#allocation2 + $0x8] sm:$0xff]
  %v37 = vld [vmem:[#allocation2 + $0x10] sm:$0xff]
  %v38 = vld [vmem:[#allocation2 + $0x18] sm:$0xff]
  %v39 = vld [vmem:[#allocation2 + $0x20] sm:$0xff]
  %v40 = vld [vmem:[#allocation2 + $0x28] sm:$0xff]
  %v41 = vld [vmem:[#allocation2 + $0x30] sm:$0xff]
  %v42 = vld [vmem:[#allocation2 + $0x38] sm:$0xff]
  %v43 = vld [vmem:[#allocation2 + $0x40] sm:$0xff]
  %v44 = vld [vmem:[#allocation2 + $0x48] sm:$0xff]
  %v45 = vld [vmem:[#allocation2 + $0x50] sm:$0xff]
  %v46 = vld [vmem:[#allocation2 + $0x58] sm:$0xff]
  %v47 = vld [vmem:[#allocation2 + $0x60] sm:$0xff]
  %v48 = vld [vmem:[#allocation2 + $0x68] sm:$0xff]
  %v49 = vld [vmem:[#allocation2 + $0x70] sm:$0xff]
  %v50 = vld [vmem:[#allocation2 + $0x78] sm:$0xff]
  %v51 = vld [vmem:[%s0] sm:$0xf]
  %v52 = vld [vmem:[%s0 + $0x4] sm:$0xf]
  %v53 = vld [vmem:[%s0 + $0x8] sm:$0xf]
  %v54 = vld [vmem:[%s0 + $0xc] sm:$0xf]
  %v55 = vld [vmem:[%s0 + $0x10] sm:$0xf]
  %v56 = vld [vmem:[%s0 + $0x14] sm:$0xf]
  %v57 = vld [vmem:[%s0 + $0x18] sm:$0xf]
  %v58 = vld [vmem:[%s0 + $0x1c] sm:$0xf]
  %v59 = vld [vmem:[%s0 + $0x20] sm:$0xf]
  %v60 = vld [vmem:[%s0 + $0x24] sm:$0xf]
  %v61 = vld [vmem:[%s0 + $0x28] sm:$0xf]
  %v62 = vld [vmem:[%s0 + $0x2c] sm:$0xf]
  %v63 = vld [vmem:[%s0 + $0x30] sm:$0xf]
  %v64 = vld [vmem:[%s0 + $0x34] sm:$0xf]
  %v65 = vld [vmem:[%s0 + $0x38] sm:$0xf]
  %v66 = vld [vmem:[%s0 + $0x3c] sm:$0xf]
  %v67 = vld [vmem:[%s1] sm:$0xf]
  %v68 = vld [vmem:[%s1 + $0x4] sm:$0xf]
  %v69 = vld [vmem:[%s1 + $0x8] sm:$0xf]
  %v70 = vld [vmem:[%s1 + $0xc] sm:$0xf]
  %v71 = vld [vmem:[%s1 + $0x10] sm:$0xf]
  %v72 = vld [vmem:[%s1 + $0x14] sm:$0xf]
  %v73 = vld [vmem:[%s1 + $0x18] sm:$0xf]
  %v74 = vld [vmem:[%s1 + $0x1c] sm:$0xf]
  %v75 = vld [vmem:[%s1 + $0x20] sm:$0xf]
  %v76 = vld [vmem:[%s1 + $0x24] sm:$0xf]
  %v77 = vld [vmem:[%s1 + $0x28] sm:$0xf]
  %v78 = vld [vmem:[%s1 + $0x2c] sm:$0xf]
  %v79 = vld [vmem:[%s1 + $0x30] sm:$0xf]
  %v80 = vld [vmem:[%s1 + $0x34] sm:$0xf]
  %v81 = vld [vmem:[%s1 + $0x38] sm:$0xf]
  %v82 = vld [vmem:[%s1 + $0x3c] sm:$0xf]
  %v99 = vunpack.c.l.b16 %v51
  %v100 = vunpack.c.l.b16 %v52
  %v101 = vunpack.c.l.b16 %v53
  %v102 = vunpack.c.l.b16 %v54
  %v103 = vunpack.c.l.b16 %v55
  %v104 = vunpack.c.l.b16 %v56
  %v105 = vunpack.c.l.b16 %v57
  %v106 = vunpack.c.l.b16 %v58
  %v107 = vunpack.c.l.b16 %v59
  %v108 = vunpack.c.l.b16 %v60
  %v109 = vunpack.c.l.b16 %v61
  %v110 = vunpack.c.l.b16 %v62
  %v111 = vunpack.c.l.b16 %v63
  %v112 = vunpack.c.l.b16 %v64
  %v113 = vunpack.c.l.b16 %v65
  %v114 = vunpack.c.l.b16 %v66
  %v115 = vpack.c.b16 %v100, %v99
  %v116 = vpack.c.b16 %v102, %v101
  %v117 = vpack.c.b16 %v104, %v103
  %v118 = vpack.c.b16 %v106, %v105
  %v119 = vpack.c.b16 %v108, %v107
  %v120 = vpack.c.b16 %v110, %v109
  %v121 = vpack.c.b16 %v112, %v111
  %v122 = vpack.c.b16 %v114, %v113
  %v147 = vunpack.c.l.b16 %v67
  %v148 = vunpack.c.l.b16 %v68
  %v149 = vunpack.c.l.b16 %v69
  %v150 = vunpack.c.l.b16 %v70
  %v151 = vunpack.c.l.b16 %v71
  %v152 = vunpack.c.l.b16 %v72
  %v153 = vunpack.c.l.b16 %v73
  %v154 = vunpack.c.l.b16 %v74
  %v155 = vunpack.c.l.b16 %v75
  %v156 = vunpack.c.l.b16 %v76
  %v157 = vunpack.c.l.b16 %v77
  %v158 = vunpack.c.l.b16 %v78
  %v159 = vunpack.c.l.b16 %v79
  %v160 = vunpack.c.l.b16 %v80
  %v161 = vunpack.c.l.b16 %v81
  %v162 = vunpack.c.l.b16 %v82
  %v163 = vpack.c.b16 %v148, %v147
  %v164 = vpack.c.b16 %v150, %v149
  %v165 = vpack.c.b16 %v152, %v151
  %v166 = vpack.c.b16 %v154, %v153
  %v167 = vpack.c.b16 %v156, %v155
  %v168 = vpack.c.b16 %v158, %v157
  %v169 = vpack.c.b16 %v160, %v159
  %v170 = vpack.c.b16 %v162, %v161
  %179 = vmatprep.subr.bf16.mxu0 0
  %180 = vmatpush1.bf16.msra.mxu0 %v163
  %181 = vmatprep.subr.bf16.mxu0 0
  %182 = vmatpush1.bf16.msra.mxu0 %v164
  %183 = vmatprep.subr.bf16.mxu0 0
  %184 = vmatpush1.bf16.msra.mxu0 %v165
  %185 = vmatprep.subr.bf16.mxu0 0
  %186 = vmatpush1.bf16.msra.mxu0 %v166
  %187 = vmatprep.subr.bf16.mxu0 0
  %188 = vmatpush1.bf16.msra.mxu0 %v167
  %189 = vmatprep.subr.bf16.mxu0 0
  %190 = vmatpush1.bf16.msra.mxu0 %v168
  %191 = vmatprep.subr.bf16.mxu0 0
  %192 = vmatpush1.bf16.msra.mxu0 %v169
  %193 = vmatprep.subr.bf16.mxu0 0
  %194 = vmatpush1.bf16.msra.mxu0 %v170
  %195 = vmatprep.subr.bf16.mxu0 0
  %196 = vmatpush1.bf16.msra.mxu0 0
  %197 = vmatprep.subr.bf16.mxu0 0
  %198 = vmatpush1.bf16.msra.mxu0 0
  %199 = vmatprep.subr.bf16.mxu0 0
  %200 = vmatpush1.bf16.msra.mxu0 0
  %201 = vmatprep.subr.bf16.mxu0 0
  %202 = vmatpush1.bf16.msra.mxu0 0
  %203 = vmatprep.subr.bf16.mxu0 0
  %204 = vmatpush1.bf16.msra.mxu0 0
  %205 = vmatprep.subr.bf16.mxu0 0
  %206 = vmatpush1.bf16.msra.mxu0 0
  %207 = vmatprep.subr.bf16.mxu0 0
  %208 = vmatpush1.bf16.msra.mxu0 0
  %209 = vmatprep.subr.bf16.mxu0 0
  %210 = vmatpush1.bf16.msra.mxu0 0
  %211 = vmatprep.mubr.bf16.mxu0 0
  %212 = vmatmul.mubr.bf16.gmra.mrb[0].mxu0 %v115
  %v213 = vpop.f32.mrb[0].mxu0
  %v214 = vadd.f32 0.0, %v213
  %v215 = vpop.f32.mrb[0].mxu0
  %v216 = vpop.f32.mrb[0].mxu0
  %v217 = vadd.f32 0.0, %v216
  %v218 = vpop.f32.mrb[0].mxu0
  %219 = vmatprep.mubr.bf16.mxu0 0
  %220 = vmatmul.mubr.bf16.gmra.mrb[0].mxu0 %v116
  %v221 = vpop.f32.mrb[0].mxu0
  %v222 = vadd.f32 0.0, %v221
  %v223 = vpop.f32.mrb[0].mxu0
  %v224 = vpop.f32.mrb[0].mxu0
  %v225 = vadd.f32 0.0, %v224
  %v226 = vpop.f32.mrb[0].mxu0
  %227 = vmatprep.mubr.bf16.mxu0 0
  %228 = vmatmul.mubr.bf16.gmra.mrb[0].mxu0 %v117
  %v229 = vpop.f32.mrb[0].mxu0
  %v230 = vadd.f32 0.0, %v229
  %v231 = vpop.f32.mrb[0].mxu0
  %v232 = vpop.f32.mrb[0].mxu0
  %v233 = vadd.f32 0.0, %v232
  %v234 = vpop.f32.mrb[0].mxu0
  %235 = vmatprep.mubr.bf16.mxu0 0
  %236 = vmatmul.mubr.bf16.gmra.mrb[0].mxu0 %v118
  %v237 = vpop.f32.mrb[0].mxu0
  %v238 = vadd.f32 0.0, %v237
  %v239 = vpop.f32.mrb[0].mxu0
  %v240 = vpop.f32.mrb[0].mxu0
  %v241 = vadd.f32 0.0, %v240
  %v242 = vpop.f32.mrb[0].mxu0
  %243 = vmatprep.mubr.bf16.mxu0 0
  %244 = vmatmul.mubr.bf16.gmra.mrb[0].mxu0 %v119
  %v245 = vpop.f32.mrb[0].mxu0
  %v246 = vadd.f32 0.0, %v245
  %v247 = vpop.f32.mrb[0].mxu0
  %v248 = vpop.f32.mrb[0].mxu0
  %v249 = vadd.f32 0.0, %v248
  %v250 = vpop.f32.mrb[0].mxu0
  %251 = vmatprep.mubr.bf16.mxu0 0
  %252 = vmatmul.mubr.bf16.gmra.mrb[0].mxu0 %v120
  %v253 = vpop.f32.mrb[0].mxu0
  %v254 = vadd.f32 0.0, %v253
  %v255 = vpop.f32.mrb[0].mxu0
  %v256 = vpop.f32.mrb[0].mxu0
  %v257 = vadd.f32 0.0, %v256
  %v258 = vpop.f32.mrb[0].mxu0
  %259 = vmatprep.mubr.bf16.mxu0 0
  %260 = vmatmul.mubr.bf16.gmra.mrb[0].mxu0 %v121
  %v261 = vpop.f32.mrb[0].mxu0
  %v262 = vadd.f32 0.0, %v261
  %v263 = vpop.f32.mrb[0].mxu0
  %v264 = vpop.f32.mrb[0].mxu0
  %v265 = vadd.f32 0.0, %v264
  %v266 = vpop.f32.mrb[0].mxu0
  %267 = vmatprep.mubr.bf16.mxu0 0
  %268 = vmatmul.mubr.bf16.gmra.mrb[0].mxu0 %v122
  %v269 = vpop.f32.mrb[0].mxu0
  %v270 = vadd.f32 0.0, %v269
  %v271 = vpop.f32.mrb[0].mxu0
  %v272 = vpop.f32.mrb[0].mxu0
  %v273 = vadd.f32 0.0, %v272
  %v274 = vpop.f32.mrb[0].mxu0
  %275 = vdwg.mxu0
  %v276 = vadd.f32 %v35, %v214
  %v277 = vadd.f32 %v36, %v217
  %v278 = vadd.f32 %v37, %v222
  %v279 = vadd.f32 %v38, %v225
  %v280 = vadd.f32 %v39, %v230
  %v281 = vadd.f32 %v40, %v233
  %v282 = vadd.f32 %v41, %v238
  %v283 = vadd.f32 %v42, %v241
  %v284 = vadd.f32 %v43, %v246
  %v285 = vadd.f32 %v44, %v249
  %v286 = vadd.f32 %v45, %v254
  %v287 = vadd.f32 %v46, %v257
  %v288 = vadd.f32 %v47, %v262
  %v289 = vadd.f32 %v48, %v265
  %v290 = vadd.f32 %v49, %v270
  %v291 = vadd.f32 %v50, %v273
  %292 = vst [vmem:[#allocation2] sm:$0xff] %v276
  %293 = vst [vmem:[#allocation2 + $0x8] sm:$0xff] %v277
  %294 = vst [vmem:[#allocation2 + $0x10] sm:$0xff] %v278
  %295 = vst [vmem:[#allocation2 + $0x18] sm:$0xff] %v279
  %296 = vst [vmem:[#allocation2 + $0x20] sm:$0xff] %v280
  %297 = vst [vmem:[#allocation2 + $0x28] sm:$0xff] %v281
  %298 = vst [vmem:[#allocation2 + $0x30] sm:$0xff] %v282
  %299 = vst [vmem:[#allocation2 + $0x38] sm:$0xff] %v283
  %300 = vst [vmem:[#allocation2 + $0x40] sm:$0xff] %v284
  %301 = vst [vmem:[#allocation2 + $0x48] sm:$0xff] %v285
  %302 = vst [vmem:[#allocation2 + $0x50] sm:$0xff] %v286
  %303 = vst [vmem:[#allocation2 + $0x58] sm:$0xff] %v287
  %304 = vst [vmem:[#allocation2 + $0x60] sm:$0xff] %v288
  %305 = vst [vmem:[#allocation2 + $0x68] sm:$0xff] %v289
  %306 = vst [vmem:[#allocation2 + $0x70] sm:$0xff] %v290
  %307 = vst [vmem:[#allocation2 + $0x78] sm:$0xff] %v291
  // Predicated region
  $region18: #{sgc_forward.3} parent=0 // pred_check
    %p308 = pneg %p15
  $region19: #{sgc_forward.3} parent=0 // pred_check_branch
    %310 = sbr.rel (%p308) target = $region21
  $region20: #{sgc_forward.3} parent=0 // pred_region
    %v311 = vld [vmem:[#allocation2] sm:$0xff]
    %v312 = vld [vmem:[#allocation2 + $0x8] sm:$0xff]
    %v313 = vld [vmem:[#allocation2 + $0x10] sm:$0xff]
    %v314 = vld [vmem:[#allocation2 + $0x18] sm:$0xff]
    %v315 = vld [vmem:[#allocation2 + $0x20] sm:$0xff]
    %v316 = vld [vmem:[#allocation2 + $0x28] sm:$0xff]
    %v317 = vld [vmem:[#allocation2 + $0x30] sm:$0xff]
    %v318 = vld [vmem:[#allocation2 + $0x38] sm:$0xff]
    %v319 = vld [vmem:[#allocation2 + $0x40] sm:$0xff]
    %v320 = vld [vmem:[#allocation2 + $0x48] sm:$0xff]
    %v321 = vld [vmem:[#allocation2 + $0x50] sm:$0xff]
    %v322 = vld [vmem:[#allocation2 + $0x58] sm:$0xff]
    %v323 = vld [vmem:[#allocation2 + $0x60] sm:$0xff]
    %v324 = vld [vmem:[#allocation2 + $0x68] sm:$0xff]
    %v325 = vld [vmem:[#allocation2 + $0x70] sm:$0xff]
    %v326 = vld [vmem:[#allocation2 + $0x78] sm:$0xff]
    %v327 = vld [vmem:[%s2] sm:$0x1]
    %v329 = vlaneseq
    %v330 = vshrl.u32 %v329, 7
    %v331 = vsub.s32 0, %v330
    %v332 = vrot.slane %v327, %v331
    %v334 = vadd.f32 %v311, %v332
    %v335 = vadd.f32 %v312, %v332
    %v336 = vadd.f32 %v313, %v332
    %v337 = vadd.f32 %v314, %v332
    %v338 = vadd.f32 %v315, %v332
    %v339 = vadd.f32 %v316, %v332
    %v340 = vadd.f32 %v317, %v332
    %v341 = vadd.f32 %v318, %v332
    %v342 = vadd.f32 %v319, %v332
    %v343 = vadd.f32 %v320, %v332
    %v344 = vadd.f32 %v321, %v332
    %v345 = vadd.f32 %v322, %v332
    %v346 = vadd.f32 %v323, %v332
    %v347 = vadd.f32 %v324, %v332
    %v348 = vadd.f32 %v325, %v332
    %v349 = vadd.f32 %v326, %v332
    %350 = vmax.xlane.f32.xlu0 %v334
    %v351 = vpop.xlane.xlu0 %350
    %352 = vmax.xlane.f32.xlu0 %v335
    %v353 = vpop.xlane.xlu0 %352
    %354 = vmax.xlane.f32.xlu0 %v336
    %v355 = vpop.xlane.xlu0 %354
    %356 = vmax.xlane.f32.xlu0 %v337
    %v357 = vpop.xlane.xlu0 %356
    %358 = vmax.xlane.f32.xlu0 %v338
    %v359 = vpop.xlane.xlu0 %358
    %360 = vmax.xlane.f32.xlu0 %v339
    %v361 = vpop.xlane.xlu0 %360
    %362 = vmax.xlane.f32.xlu0 %v340
    %v363 = vpop.xlane.xlu0 %362
    %364 = vmax.xlane.f32.xlu0 %v341
    %v365 = vpop.xlane.xlu0 %364
    %366 = vmax.xlane.f32.xlu0 %v342
    %v367 = vpop.xlane.xlu0 %366
    %368 = vmax.xlane.f32.xlu0 %v343
    %v369 = vpop.xlane.xlu0 %368
    %370 = vmax.xlane.f32.xlu0 %v344
    %v371 = vpop.xlane.xlu0 %370
    %372 = vmax.xlane.f32.xlu0 %v345
    %v373 = vpop.xlane.xlu0 %372
    %374 = vmax.xlane.f32.xlu0 %v346
    %v375 = vpop.xlane.xlu0 %374
    %376 = vmax.xlane.f32.xlu0 %v347
    %v377 = vpop.xlane.xlu0 %376
    %378 = vmax.xlane.f32.xlu0 %v348
    %v379 = vpop.xlane.xlu0 %378
    %380 = vmax.xlane.f32.xlu0 %v349
    %v381 = vpop.xlane.xlu0 %380
    %v382 = vsub.f32 %v334, %v351
    %v383 = vsub.f32 %v335, %v353
    %v384 = vsub.f32 %v336, %v355
    %v385 = vsub.f32 %v337, %v357
    %v386 = vsub.f32 %v338, %v359
    %v387 = vsub.f32 %v339, %v361
    %v388 = vsub.f32 %v340, %v363
    %v389 = vsub.f32 %v341, %v365
    %v390 = vsub.f32 %v342, %v367
    %v391 = vsub.f32 %v343, %v369
    %v392 = vsub.f32 %v344, %v371
    %v393 = vsub.f32 %v345, %v373
    %v394 = vsub.f32 %v346, %v375
    %v395 = vsub.f32 %v347, %v377
    %v396 = vsub.f32 %v348, %v379
    %v397 = vsub.f32 %v349, %v381
    %v398 = vmul.f32 %v382, 1.442695
    %v399 = vpow.pop %v398
    %v400 = vmul.f32 %v383, 1.442695
    %v401 = vpow.pop %v400
    %v402 = vmul.f32 %v384, 1.442695
    %v403 = vpow.pop %v402
    %v404 = vmul.f32 %v385, 1.442695
    %v405 = vpow.pop %v404
    %v406 = vmul.f32 %v386, 1.442695
    %v407 = vpow.pop %v406
    %v408 = vmul.f32 %v387, 1.442695
    %v409 = vpow.pop %v408
    %v410 = vmul.f32 %v388, 1.442695
    %v411 = vpow.pop %v410
    %v412 = vmul.f32 %v389, 1.442695
    %v413 = vpow.pop %v412
    %v414 = vmul.f32 %v390, 1.442695
    %v415 = vpow.pop %v414
    %v416 = vmul.f32 %v391, 1.442695
    %v417 = vpow.pop %v416
    %v418 = vmul.f32 %v392, 1.442695
    %v419 = vpow.pop %v418
    %v420 = vmul.f32 %v393, 1.442695
    %v421 = vpow.pop %v420
    %v422 = vmul.f32 %v394, 1.442695
    %v423 = vpow.pop %v422
    %v424 = vmul.f32 %v395, 1.442695
    %v425 = vpow.pop %v424
    %v426 = vmul.f32 %v396, 1.442695
    %v427 = vpow.pop %v426
    %v428 = vmul.f32 %v397, 1.442695
    %v429 = vpow.pop %v428
    %430 = vadd.xlane.f32.xlu0 %v399
    %v431 = vpop.xlane.xlu0 %430
    %432 = vadd.xlane.f32.xlu0 %v401
    %v433 = vpop.xlane.xlu0 %432
    %434 = vadd.xlane.f32.xlu0 %v403
    %v435 = vpop.xlane.xlu0 %434
    %436 = vadd.xlane.f32.xlu0 %v405
    %v437 = vpop.xlane.xlu0 %436
    %438 = vadd.xlane.f32.xlu0 %v407
    %v439 = vpop.xlane.xlu0 %438
    %440 = vadd.xlane.f32.xlu0 %v409
    %v441 = vpop.xlane.xlu0 %440
    %442 = vadd.xlane.f32.xlu0 %v411
    %v443 = vpop.xlane.xlu0 %442
    %444 = vadd.xlane.f32.xlu0 %v413
    %v445 = vpop.xlane.xlu0 %444
    %446 = vadd.xlane.f32.xlu0 %v415
    %v447 = vpop.xlane.xlu0 %446
    %448 = vadd.xlane.f32.xlu0 %v417
    %v449 = vpop.xlane.xlu0 %448
    %450 = vadd.xlane.f32.xlu0 %v419
    %v451 = vpop.xlane.xlu0 %450
    %452 = vadd.xlane.f32.xlu0 %v421
    %v453 = vpop.xlane.xlu0 %452
    %454 = vadd.xlane.f32.xlu0 %v423
    %v455 = vpop.xlane.xlu0 %454
    %456 = vadd.xlane.f32.xlu0 %v425
    %v457 = vpop.xlane.xlu0 %456
    %458 = vadd.xlane.f32.xlu0 %v427
    %v459 = vpop.xlane.xlu0 %458
    %460 = vadd.xlane.f32.xlu0 %v429
    %v461 = vpop.xlane.xlu0 %460
    %v462 = vlog2.pop %v431
    %v463 = vmul.f32 %v462, 0.6931472
    %v464 = vlog2.pop %v433
    %v465 = vmul.f32 %v464, 0.6931472
    %v466 = vlog2.pop %v435
    %v467 = vmul.f32 %v466, 0.6931472
    %v468 = vlog2.pop %v437
    %v469 = vmul.f32 %v468, 0.6931472
    %v470 = vlog2.pop %v439
    %v471 = vmul.f32 %v470, 0.6931472
    %v472 = vlog2.pop %v441
    %v473 = vmul.f32 %v472, 0.6931472
    %v474 = vlog2.pop %v443
    %v475 = vmul.f32 %v474, 0.6931472
    %v476 = vlog2.pop %v445
    %v477 = vmul.f32 %v476, 0.6931472
    %v478 = vlog2.pop %v447
    %v479 = vmul.f32 %v478, 0.6931472
    %v480 = vlog2.pop %v449
    %v481 = vmul.f32 %v480, 0.6931472
    %v482 = vlog2.pop %v451
    %v483 = vmul.f32 %v482, 0.6931472
    %v484 = vlog2.pop %v453
    %v485 = vmul.f32 %v484, 0.6931472
    %v486 = vlog2.pop %v455
    %v487 = vmul.f32 %v486, 0.6931472
    %v488 = vlog2.pop %v457
    %v489 = vmul.f32 %v488, 0.6931472
    %v490 = vlog2.pop %v459
    %v491 = vmul.f32 %v490, 0.6931472
    %v492 = vlog2.pop %v461
    %v493 = vmul.f32 %v492, 0.6931472
    %v494 = vsub.f32 %v382, %v463
    %v495 = vsub.f32 %v383, %v465
    %v496 = vsub.f32 %v384, %v467
    %v497 = vsub.f32 %v385, %v469
    %v498 = vsub.f32 %v386, %v471
    %v499 = vsub.f32 %v387, %v473
    %v500 = vsub.f32 %v388, %v475
    %v501 = vsub.f32 %v389, %v477
    %v502 = vsub.f32 %v390, %v479
    %v503 = vsub.f32 %v391, %v481
    %v504 = vsub.f32 %v392, %v483
    %v505 = vsub.f32 %v393, %v485
    %v506 = vsub.f32 %v394, %v487
    %v507 = vsub.f32 %v395, %v489
    %v508 = vsub.f32 %v396, %v491
    %v509 = vsub.f32 %v397, %v493
    %510 = vst [vmem:[%s3] sm:$0xff] %v494
    %511 = vst [vmem:[%s3 + $0x8] sm:$0xff] %v495
    %512 = vst [vmem:[%s3 + $0x10] sm:$0xff] %v496
    %513 = vst [vmem:[%s3 + $0x18] sm:$0xff] %v497
    %514 = vst [vmem:[%s3 + $0x20] sm:$0xff] %v498
    %515 = vst [vmem:[%s3 + $0x28] sm:$0xff] %v499
    %516 = vst [vmem:[%s3 + $0x30] sm:$0xff] %v500
    %517 = vst [vmem:[%s3 + $0x38] sm:$0xff] %v501
    %518 = vst [vmem:[%s3 + $0x40] sm:$0xff] %v502
    %519 = vst [vmem:[%s3 + $0x48] sm:$0xff] %v503
    %520 = vst [vmem:[%s3 + $0x50] sm:$0xff] %v504
    %521 = vst [vmem:[%s3 + $0x58] sm:$0xff] %v505
    %522 = vst [vmem:[%s3 + $0x60] sm:$0xff] %v506
    %523 = vst [vmem:[%s3 + $0x68] sm:$0xff] %v507
    %524 = vst [vmem:[%s3 + $0x70] sm:$0xff] %v508
    %525 = vst [vmem:[%s3 + $0x78] sm:$0xff] %v509
  $region21: #{sgc_forward.3} parent=0 // pred_fallthru
    _
  // Predicated region
  $region22: #{sgc_forward.3} parent=0 // pred_check
    _
  $region23: #{sgc_forward.3} parent=0 // pred_check_branch
    %527 = sbr.rel (0) target = $region25
  $region24: #{sgc_forward.3} parent=0 // pred_region
    _
  $region25: #{sgc_forward.3} parent=0 // pred_fallthru
    _
  // Predicated region
  $region26: #{sgc_forward.3} parent=0 // pred_check
    _
  $region27: #{sgc_forward.3} parent=0 // pred_check_branch
    %529 = sbr.rel (0) target = $region29
  $region28: #{sgc_forward.3} parent=0 // pred_region
    _
  $region29: #{sgc_forward.3} parent=0 // pred_fallthru
    _

// kernel: sgc_forward.2
$region0: #{sgc_forward.2}
  #allocation0 [shape = 'u32[]', space=smem, size = 0x4, offset = 0x4, fixed_abs, tag = 'smem constant byte address 0x4 - core index']
  #allocation1 [shape = 'u32[144,128]{1,0:T(1,128)}', space=vmem, size = 0x12000, scoped, tag = 'internal scratch']
  #allocation2 [shape = 'f32[128,128]{1,0:T(8,128)}', space=vmem, size = 0x10000, scoped, tag = 'scratch operand']
  %s0 = inlined_call_operand.vmem [shape: bf16[128,128], index: 0, kind: input, shape index: {}]
  %s1 = inlined_call_operand.vmem [shape: bf16[128,128], index: 1, kind: input, shape index: {}]
  %s2 = inlined_call_operand.vmem [shape: bf16[128,128], index: 2, kind: output, shape index: {}]
  %s3 = sld [smem:[#allocation0]]
  $region26: #{sgc_forward.2} parent=0
    _
  %s5 = ssub.s32 1, %s3
  %s6 = scalar_select 0, %s5, %s3
  // Predicated region
  $region2: #{sgc_forward.2} parent=0 // pred_check
    _
  $region3: #{sgc_forward.2} parent=0 // pred_check_branch
    %8 = sbr.rel (0) target = $region5
  $region4: #{sgc_forward.2} parent=0 // pred_region
    _
  $region5: #{sgc_forward.2} parent=0 // pred_fallthru
    _
  // Predicated region
  $region6: #{sgc_forward.2} parent=0 // pred_check
    _
  $region7: #{sgc_forward.2} parent=0 // pred_check_branch
    %10 = sbr.rel (0) target = $region9
  $region8: #{sgc_forward.2} parent=0 // pred_region
    _
  $region9: #{sgc_forward.2} parent=0 // pred_fallthru
    _
  %p12 = scmp.eq.s32.totalorder 0, 0
  // Predicated region
  $region10: #{sgc_forward.2} parent=0 // pred_check
    %p13 = pneg %p12
  $region11: #{sgc_forward.2} parent=0 // pred_check_branch
    %15 = sbr.rel (%p13) target = $region13
  $region12: #{sgc_forward.2} parent=0 // pred_region
    %16 = vst [vmem:[#allocation2] sm:$0xff] 0.0
    %17 = vst [vmem:[#allocation2 + $0x8] sm:$0xff] 0.0
    %18 = vst [vmem:[#allocation2 + $0x10] sm:$0xff] 0.0
    %19 = vst [vmem:[#allocation2 + $0x18] sm:$0xff] 0.0
    %20 = vst [vmem:[#allocation2 + $0x20] sm:$0xff] 0.0
    %21 = vst [vmem:[#allocation2 + $0x28] sm:$0xff] 0.0
    %22 = vst [vmem:[#allocation2 + $0x30] sm:$0xff] 0.0
    %23 = vst [vmem:[#allocation2 + $0x38] sm:$0xff] 0.0
    %24 = vst [vmem:[#allocation2 + $0x40] sm:$0xff] 0.0
    %25 = vst [vmem:[#allocation2 + $0x48] sm:$0xff] 0.0
    %26 = vst [vmem:[#allocation2 + $0x50] sm:$0xff] 0.0
    %27 = vst [vmem:[#allocation2 + $0x58] sm:$0xff] 0.0
    %28 = vst [vmem:[#allocation2 + $0x60] sm:$0xff] 0.0
    %29 = vst [vmem:[#allocation2 + $0x68] sm:$0xff] 0.0
    %30 = vst [vmem:[#allocation2 + $0x70] sm:$0xff] 0.0
    %31 = vst [vmem:[#allocation2 + $0x78] sm:$0xff] 0.0
  $region13: #{sgc_forward.2} parent=0 // pred_fallthru
    _
  %v32 = vld [vmem:[#allocation2] sm:$0xff]
  %v33 = vld [vmem:[#allocation2 + $0x8] sm:$0xff]
  %v34 = vld [vmem:[#allocation2 + $0x10] sm:$0xff]
  %v35 = vld [vmem:[#allocation2 + $0x18] sm:$0xff]
  %v36 = vld [vmem:[#allocation2 + $0x20] sm:$0xff]
  %v37 = vld [vmem:[#allocation2 + $0x28] sm:$0xff]
  %v38 = vld [vmem:[#allocation2 + $0x30] sm:$0xff]
  %v39 = vld [vmem:[#allocation2 + $0x38] sm:$0xff]
  %v40 = vld [vmem:[#allocation2 + $0x40] sm:$0xff]
  %v41 = vld [vmem:[#allocation2 + $0x48] sm:$0xff]
  %v42 = vld [vmem:[#allocation2 + $0x50] sm:$0xff]
  %v43 = vld [vmem:[#allocation2 + $0x58] sm:$0xff]
  %v44 = vld [vmem:[#allocation2 + $0x60] sm:$0xff]
  %v45 = vld [vmem:[#allocation2 + $0x68] sm:$0xff]
  %v46 = vld [vmem:[#allocation2 + $0x70] sm:$0xff]
  %v47 = vld [vmem:[#allocation2 + $0x78] sm:$0xff]
  %v48 = vld [vmem:[%s0] sm:$0xf]
  %v49 = vld [vmem:[%s0 + $0x4] sm:$0xf]
  %v50 = vld [vmem:[%s0 + $0x8] sm:$0xf]
  %v51 = vld [vmem:[%s0 + $0xc] sm:$0xf]
  %v52 = vld [vmem:[%s0 + $0x10] sm:$0xf]
  %v53 = vld [vmem:[%s0 + $0x14] sm:$0xf]
  %v54 = vld [vmem:[%s0 + $0x18] sm:$0xf]
  %v55 = vld [vmem:[%s0 + $0x1c] sm:$0xf]
  %v56 = vld [vmem:[%s0 + $0x20] sm:$0xf]
  %v57 = vld [vmem:[%s0 + $0x24] sm:$0xf]
  %v58 = vld [vmem:[%s0 + $0x28] sm:$0xf]
  %v59 = vld [vmem:[%s0 + $0x2c] sm:$0xf]
  %v60 = vld [vmem:[%s0 + $0x30] sm:$0xf]
  %v61 = vld [vmem:[%s0 + $0x34] sm:$0xf]
  %v62 = vld [vmem:[%s0 + $0x38] sm:$0xf]
  %v63 = vld [vmem:[%s0 + $0x3c] sm:$0xf]
  %v64 = vld [vmem:[%s1] sm:$0xf]
  %v65 = vld [vmem:[%s1 + $0x4] sm:$0xf]
  %v66 = vld [vmem:[%s1 + $0x8] sm:$0xf]
  %v67 = vld [vmem:[%s1 + $0xc] sm:$0xf]
  %v68 = vld [vmem:[%s1 + $0x10] sm:$0xf]
  %v69 = vld [vmem:[%s1 + $0x14] sm:$0xf]
  %v70 = vld [vmem:[%s1 + $0x18] sm:$0xf]
  %v71 = vld [vmem:[%s1 + $0x1c] sm:$0xf]
  %v72 = vld [vmem:[%s1 + $0x20] sm:$0xf]
  %v73 = vld [vmem:[%s1 + $0x24] sm:$0xf]
  %v74 = vld [vmem:[%s1 + $0x28] sm:$0xf]
  %v75 = vld [vmem:[%s1 + $0x2c] sm:$0xf]
  %v76 = vld [vmem:[%s1 + $0x30] sm:$0xf]
  %v77 = vld [vmem:[%s1 + $0x34] sm:$0xf]
  %v78 = vld [vmem:[%s1 + $0x38] sm:$0xf]
  %v79 = vld [vmem:[%s1 + $0x3c] sm:$0xf]
  %v96 = vunpack.c.l.b16 %v48
  %v97 = vunpack.c.l.b16 %v49
  %v98 = vunpack.c.l.b16 %v50
  %v99 = vunpack.c.l.b16 %v51
  %v100 = vunpack.c.l.b16 %v52
  %v101 = vunpack.c.l.b16 %v53
  %v102 = vunpack.c.l.b16 %v54
  %v103 = vunpack.c.l.b16 %v55
  %v104 = vunpack.c.l.b16 %v56
  %v105 = vunpack.c.l.b16 %v57
  %v106 = vunpack.c.l.b16 %v58
  %v107 = vunpack.c.l.b16 %v59
  %v108 = vunpack.c.l.b16 %v60
  %v109 = vunpack.c.l.b16 %v61
  %v110 = vunpack.c.l.b16 %v62
  %v111 = vunpack.c.l.b16 %v63
  %v112 = vpack.c.b16 %v97, %v96
  %v113 = vpack.c.b16 %v99, %v98
  %v114 = vpack.c.b16 %v101, %v100
  %v115 = vpack.c.b16 %v103, %v102
  %v116 = vpack.c.b16 %v105, %v104
  %v117 = vpack.c.b16 %v107, %v106
  %v118 = vpack.c.b16 %v109, %v108
  %v119 = vpack.c.b16 %v111, %v110
  %v144 = vunpack.c.l.b16 %v64
  %v145 = vunpack.c.l.b16 %v65
  %v146 = vunpack.c.l.b16 %v66
  %v147 = vunpack.c.l.b16 %v67
  %v148 = vunpack.c.l.b16 %v68
  %v149 = vunpack.c.l.b16 %v69
  %v150 = vunpack.c.l.b16 %v70
  %v151 = vunpack.c.l.b16 %v71
  %v152 = vunpack.c.l.b16 %v72
  %v153 = vunpack.c.l.b16 %v73
  %v154 = vunpack.c.l.b16 %v74
  %v155 = vunpack.c.l.b16 %v75
  %v156 = vunpack.c.l.b16 %v76
  %v157 = vunpack.c.l.b16 %v77
  %v158 = vunpack.c.l.b16 %v78
  %v159 = vunpack.c.l.b16 %v79
  %v160 = vpack.c.b16 %v145, %v144
  %v161 = vpack.c.b16 %v147, %v146
  %v162 = vpack.c.b16 %v149, %v148
  %v163 = vpack.c.b16 %v151, %v150
  %v164 = vpack.c.b16 %v153, %v152
  %v165 = vpack.c.b16 %v155, %v154
  %v166 = vpack.c.b16 %v157, %v156
  %v167 = vpack.c.b16 %v159, %v158
  %176 = vmatprep.subr.bf16.mxu0 0
  %177 = vmatpush1.bf16.msra.mxu0 %v160
  %178 = vmatprep.subr.bf16.mxu0 0
  %179 = vmatpush1.bf16.msra.mxu0 %v161
  %180 = vmatprep.subr.bf16.mxu0 0
  %181 = vmatpush1.bf16.msra.mxu0 %v162
  %182 = vmatprep.subr.bf16.mxu0 0
  %183 = vmatpush1.bf16.msra.mxu0 %v163
  %184 = vmatprep.subr.bf16.mxu0 0
  %185 = vmatpush1.bf16.msra.mxu0 %v164
  %186 = vmatprep.subr.bf16.mxu0 0
  %187 = vmatpush1.bf16.msra.mxu0 %v165
  %188 = vmatprep.subr.bf16.mxu0 0
  %189 = vmatpush1.bf16.msra.mxu0 %v166
  %190 = vmatprep.subr.bf16.mxu0 0
  %191 = vmatpush1.bf16.msra.mxu0 %v167
  %192 = vmatprep.subr.bf16.mxu0 0
  %193 = vmatpush1.bf16.msra.mxu0 0
  %194 = vmatprep.subr.bf16.mxu0 0
  %195 = vmatpush1.bf16.msra.mxu0 0
  %196 = vmatprep.subr.bf16.mxu0 0
  %197 = vmatpush1.bf16.msra.mxu0 0
  %198 = vmatprep.subr.bf16.mxu0 0
  %199 = vmatpush1.bf16.msra.mxu0 0
  %200 = vmatprep.subr.bf16.mxu0 0
  %201 = vmatpush1.bf16.msra.mxu0 0
  %202 = vmatprep.subr.bf16.mxu0 0
  %203 = vmatpush1.bf16.msra.mxu0 0
  %204 = vmatprep.subr.bf16.mxu0 0
  %205 = vmatpush1.bf16.msra.mxu0 0
  %206 = vmatprep.subr.bf16.mxu0 0
  %207 = vmatpush1.bf16.msra.mxu0 0
  %208 = vmatprep.mubr.bf16.mxu0 0
  %209 = vmatmul.mubr.bf16.gmra.mrb[0].mxu0 %v112
  %v210 = vpop.f32.mrb[0].mxu0
  %v211 = vadd.f32 0.0, %v210
  %v212 = vpop.f32.mrb[0].mxu0
  %v213 = vpop.f32.mrb[0].mxu0
  %v214 = vadd.f32 0.0, %v213
  %v215 = vpop.f32.mrb[0].mxu0
  %216 = vmatprep.mubr.bf16.mxu0 0
  %217 = vmatmul.mubr.bf16.gmra.mrb[0].mxu0 %v113
  %v218 = vpop.f32.mrb[0].mxu0
  %v219 = vadd.f32 0.0, %v218
  %v220 = vpop.f32.mrb[0].mxu0
  %v221 = vpop.f32.mrb[0].mxu0
  %v222 = vadd.f32 0.0, %v221
  %v223 = vpop.f32.mrb[0].mxu0
  %224 = vmatprep.mubr.bf16.mxu0 0
  %225 = vmatmul.mubr.bf16.gmra.mrb[0].mxu0 %v114
  %v226 = vpop.f32.mrb[0].mxu0
  %v227 = vadd.f32 0.0, %v226
  %v228 = vpop.f32.mrb[0].mxu0
  %v229 = vpop.f32.mrb[0].mxu0
  %v230 = vadd.f32 0.0, %v229
  %v231 = vpop.f32.mrb[0].mxu0
  %232 = vmatprep.mubr.bf16.mxu0 0
  %233 = vmatmul.mubr.bf16.gmra.mrb[0].mxu0 %v115
  %v234 = vpop.f32.mrb[0].mxu0
  %v235 = vadd.f32 0.0, %v234
  %v236 = vpop.f32.mrb[0].mxu0
  %v237 = vpop.f32.mrb[0].mxu0
  %v238 = vadd.f32 0.0, %v237
  %v239 = vpop.f32.mrb[0].mxu0
  %240 = vmatprep.mubr.bf16.mxu0 0
  %241 = vmatmul.mubr.bf16.gmra.mrb[0].mxu0 %v116
  %v242 = vpop.f32.mrb[0].mxu0
  %v243 = vadd.f32 0.0, %v242
  %v244 = vpop.f32.mrb[0].mxu0
  %v245 = vpop.f32.mrb[0].mxu0
  %v246 = vadd.f32 0.0, %v245
  %v247 = vpop.f32.mrb[0].mxu0
  %248 = vmatprep.mubr.bf16.mxu0 0
  %249 = vmatmul.mubr.bf16.gmra.mrb[0].mxu0 %v117
  %v250 = vpop.f32.mrb[0].mxu0
  %v251 = vadd.f32 0.0, %v250
  %v252 = vpop.f32.mrb[0].mxu0
  %v253 = vpop.f32.mrb[0].mxu0
  %v254 = vadd.f32 0.0, %v253
  %v255 = vpop.f32.mrb[0].mxu0
  %256 = vmatprep.mubr.bf16.mxu0 0
  %257 = vmatmul.mubr.bf16.gmra.mrb[0].mxu0 %v118
  %v258 = vpop.f32.mrb[0].mxu0
  %v259 = vadd.f32 0.0, %v258
  %v260 = vpop.f32.mrb[0].mxu0
  %v261 = vpop.f32.mrb[0].mxu0
  %v262 = vadd.f32 0.0, %v261
  %v263 = vpop.f32.mrb[0].mxu0
  %264 = vmatprep.mubr.bf16.mxu0 0
  %265 = vmatmul.mubr.bf16.gmra.mrb[0].mxu0 %v119
  %v266 = vpop.f32.mrb[0].mxu0
  %v267 = vadd.f32 0.0, %v266
  %v268 = vpop.f32.mrb[0].mxu0
  %v269 = vpop.f32.mrb[0].mxu0
  %v270 = vadd.f32 0.0, %v269
  %v271 = vpop.f32.mrb[0].mxu0
  %272 = vdwg.mxu0
  %v273 = vadd.f32 %v32, %v211
  %v274 = vadd.f32 %v33, %v214
  %v275 = vadd.f32 %v34, %v219
  %v276 = vadd.f32 %v35, %v222
  %v277 = vadd.f32 %v36, %v227
  %v278 = vadd.f32 %v37, %v230
  %v279 = vadd.f32 %v38, %v235
  %v280 = vadd.f32 %v39, %v238
  %v281 = vadd.f32 %v40, %v243
  %v282 = vadd.f32 %v41, %v246
  %v283 = vadd.f32 %v42, %v251
  %v284 = vadd.f32 %v43, %v254
  %v285 = vadd.f32 %v44, %v259
  %v286 = vadd.f32 %v45, %v262
  %v287 = vadd.f32 %v46, %v267
  %v288 = vadd.f32 %v47, %v270
  %289 = vst [vmem:[#allocation2] sm:$0xff] %v273
  %290 = vst [vmem:[#allocation2 + $0x8] sm:$0xff] %v274
  %291 = vst [vmem:[#allocation2 + $0x10] sm:$0xff] %v275
  %292 = vst [vmem:[#allocation2 + $0x18] sm:$0xff] %v276
  %293 = vst [vmem:[#allocation2 + $0x20] sm:$0xff] %v277
  %294 = vst [vmem:[#allocation2 + $0x28] sm:$0xff] %v278
  %295 = vst [vmem:[#allocation2 + $0x30] sm:$0xff] %v279
  %296 = vst [vmem:[#allocation2 + $0x38] sm:$0xff] %v280
  %297 = vst [vmem:[#allocation2 + $0x40] sm:$0xff] %v281
  %298 = vst [vmem:[#allocation2 + $0x48] sm:$0xff] %v282
  %299 = vst [vmem:[#allocation2 + $0x50] sm:$0xff] %v283
  %300 = vst [vmem:[#allocation2 + $0x58] sm:$0xff] %v284
  %301 = vst [vmem:[#allocation2 + $0x60] sm:$0xff] %v285
  %302 = vst [vmem:[#allocation2 + $0x68] sm:$0xff] %v286
  %303 = vst [vmem:[#allocation2 + $0x70] sm:$0xff] %v287
  %304 = vst [vmem:[#allocation2 + $0x78] sm:$0xff] %v288
  // Predicated region
  $region14: #{sgc_forward.2} parent=0 // pred_check
    %p305 = pneg %p12
  $region15: #{sgc_forward.2} parent=0 // pred_check_branch
    %307 = sbr.rel (%p305) target = $region17
  $region16: #{sgc_forward.2} parent=0 // pred_region
    %v308 = vld [vmem:[#allocation2] sm:$0xff]
    %v309 = vld [vmem:[#allocation2 + $0x8] sm:$0xff]
    %v310 = vld [vmem:[#allocation2 + $0x10] sm:$0xff]
    %v311 = vld [vmem:[#allocation2 + $0x18] sm:$0xff]
    %v312 = vld [vmem:[#allocation2 + $0x20] sm:$0xff]
    %v313 = vld [vmem:[#allocation2 + $0x28] sm:$0xff]
    %v314 = vld [vmem:[#allocation2 + $0x30] sm:$0xff]
    %v315 = vld [vmem:[#allocation2 + $0x38] sm:$0xff]
    %v316 = vld [vmem:[#allocation2 + $0x40] sm:$0xff]
    %v317 = vld [vmem:[#allocation2 + $0x48] sm:$0xff]
    %v318 = vld [vmem:[#allocation2 + $0x50] sm:$0xff]
    %v319 = vld [vmem:[#allocation2 + $0x58] sm:$0xff]
    %v320 = vld [vmem:[#allocation2 + $0x60] sm:$0xff]
    %v321 = vld [vmem:[#allocation2 + $0x68] sm:$0xff]
    %v322 = vld [vmem:[#allocation2 + $0x70] sm:$0xff]
    %v323 = vld [vmem:[#allocation2 + $0x78] sm:$0xff]
    %v324 = vpack.c.bf16 %v309, %v308
    %v325 = vpack.c.bf16 %v311, %v310
    %v326 = vpack.c.bf16 %v313, %v312
    %v327 = vpack.c.bf16 %v315, %v314
    %v328 = vpack.c.bf16 %v317, %v316
    %v329 = vpack.c.bf16 %v319, %v318
    %v330 = vpack.c.bf16 %v321, %v320
    %v331 = vpack.c.bf16 %v323, %v322
    %v340 = vunpack.c.l.b16 %v324
    %v341 = vunpack.c.h.b16 %v324
    %v342 = vunpack.c.l.b16 %v325
    %v343 = vunpack.c.h.b16 %v325
    %v344 = vunpack.c.l.b16 %v326
    %v345 = vunpack.c.h.b16 %v326
    %v346 = vunpack.c.l.b16 %v327
    %v347 = vunpack.c.h.b16 %v327
    %v348 = vunpack.c.l.b16 %v328
    %v349 = vunpack.c.h.b16 %v328
    %v350 = vunpack.c.l.b16 %v329
    %v351 = vunpack.c.h.b16 %v329
    %v352 = vunpack.c.l.b16 %v330
    %v353 = vunpack.c.h.b16 %v330
    %v354 = vunpack.c.l.b16 %v331
    %v355 = vunpack.c.h.b16 %v331
    %v356 = vpack.c.b16 %v340, %v340
    %v357 = vpack.c.b16 %v341, %v341
    %v358 = vpack.c.b16 %v342, %v342
    %v359 = vpack.c.b16 %v343, %v343
    %v360 = vpack.c.b16 %v344, %v344
    %v361 = vpack.c.b16 %v345, %v345
    %v362 = vpack.c.b16 %v346, %v346
    %v363 = vpack.c.b16 %v347, %v347
    %v364 = vpack.c.b16 %v348, %v348
    %v365 = vpack.c.b16 %v349, %v349
    %v366 = vpack.c.b16 %v350, %v350
    %v367 = vpack.c.b16 %v351, %v351
    %v368 = vpack.c.b16 %v352, %v352
    %v369 = vpack.c.b16 %v353, %v353
    %v370 = vpack.c.b16 %v354, %v354
    %v371 = vpack.c.b16 %v355, %v355
    %388 = vst [vmem:[%s2] sm:$0xf] %v356
    %389 = vst [vmem:[%s2 + $0x4] sm:$0xf] %v357
    %390 = vst [vmem:[%s2 + $0x8] sm:$0xf] %v358
    %391 = vst [vmem:[%s2 + $0xc] sm:$0xf] %v359
    %392 = vst [vmem:[%s2 + $0x10] sm:$0xf] %v360
    %393 = vst [vmem:[%s2 + $0x14] sm:$0xf] %v361
    %394 = vst [vmem:[%s2 + $0x18] sm:$0xf] %v362
    %395 = vst [vmem:[%s2 + $0x1c] sm:$0xf] %v363
    %396 = vst [vmem:[%s2 + $0x20] sm:$0xf] %v364
    %397 = vst [vmem:[%s2 + $0x24] sm:$0xf] %v365
    %398 = vst [vmem:[%s2 + $0x28] sm:$0xf] %v366
    %399 = vst [vmem:[%s2 + $0x2c] sm:$0xf] %v367
    %400 = vst [vmem:[%s2 + $0x30] sm:$0xf] %v368
    %401 = vst [vmem:[%s2 + $0x34] sm:$0xf] %v369
    %402 = vst [vmem:[%s2 + $0x38] sm:$0xf] %v370
    %403 = vst [vmem:[%s2 + $0x3c] sm:$0xf] %v371
  $region17: #{sgc_forward.2} parent=0 // pred_fallthru
    _
  // Predicated region
  $region18: #{sgc_forward.2} parent=0 // pred_check
    _
  $region19: #{sgc_forward.2} parent=0 // pred_check_branch
    %405 = sbr.rel (0) target = $region21
  $region20: #{sgc_forward.2} parent=0 // pred_region
    _
  $region21: #{sgc_forward.2} parent=0 // pred_fallthru
    _
  // Predicated region
  $region22: #{sgc_forward.2} parent=0 // pred_check
    _
  $region23: #{sgc_forward.2} parent=0 // pred_check_branch
    %407 = sbr.rel (0) target = $region25
  $region24: #{sgc_forward.2} parent=0 // pred_region
    _
  $region25: #{sgc_forward.2} parent=0 // pred_fallthru
    _

</llo_original>
